<compile_context>
chip_gen: v7x
topology: tpu7x:2x2x1
jax: 0.10.0
libtpu: 0.0.40
codegen_flags: <defaults>
</compile_context>

<pallas_src>
import math

import jax
import jax.numpy as jnp
from jax import lax
from jax.experimental import pallas as pl
from jax.experimental.pallas import tpu as pltpu


def spatial_attention_kernel(w1_ref, x_ref, w2t_ref, w3_ref, bs_ref, vst_ref, out_ref):
    # w1_ref : SMEM (T,)        -- W_1 scalars
    # x_ref  : VMEM (T, F, B*N) -- x transposed so lanes carry B*N
    # w2t_ref: VMEM (T, F)      -- W_2.T
    # w3_ref : VMEM (F, 1)      -- W_3
    # bs_ref : VMEM (N, N)      -- b_s (leading singleton dropped)
    # vst_ref: VMEM (N, N)      -- v_s.T
    # out_ref: VMEM (B, N, N)
    T, F, BN = x_ref.shape
    B, N, _ = out_ref.shape

    x = x_ref[...]                       # single VMEM read of x; stays in vregs
    w3 = w3_ref[...]                     # (F, 1)

    # rhs[t, m] = sum_f W_3[f] * x[t, f, m]            -> (T, B*N)
    rhs = jnp.sum(x * w3[None, :, :], axis=1)

    # lhs1[f, m] = sum_t W_1[t] * x[t, f, m]           -> (F, B*N)
    # W_1[t] read as SMEM scalars, splat-multiplied against the resident x slabs.
    lhs1 = w1_ref[0] * x[0]
    for t in range(1, T):
        lhs1 = lhs1 + w1_ref[t] * x[t]

    # lhs[t', m] = sum_f W_2[f, t'] * lhs1[f, m]       -> (T, B*N)
    lhs = jnp.dot(w2t_ref[...], lhs1, preferred_element_type=jnp.float32)

    bs = bs_ref[...]                     # (N, N)
    vst = vst_ref[...]                   # (N, N) == v_s.T

    # Per-batch tail (B is tiny and static -> unrolled at trace time).
    for b in range(B):
        lo = b * N
        lhs_b = lhs[:, lo:lo + N]        # (T, N)
        rhs_b = rhs[:, lo:lo + N]        # (T, N)

        # product[i, j] = sum_t lhs_b[t, i] * rhs_b[t, j]   -> (N, N)
        prod = lax.dot_general(
            lhs_b, rhs_b, (((0,), (0,)), ((), ())),
            preferred_element_type=jnp.float32)

        sig = jax.nn.sigmoid(prod + bs)                      # (N, N)

        # s[i, k] = sum_j sig[i, j] * v_s[k, j] == sig @ v_s.T
        s = jnp.dot(sig, vst, preferred_element_type=jnp.float32)

        # softmax over the first vertex axis (dim=1 of the (B, N, N) output)
        m = jnp.max(s, axis=0, keepdims=True)
        e = jnp.exp(s - m)
        denom = jnp.sum(e, axis=0, keepdims=True)
        inv = pl.reciprocal(denom)       # exact; approx=True -> EUP if tol allows
        out_ref[b] = (e * inv).astype(out_ref.dtype)


def spatial_attention(x, W_1, W_2, W_3, b_s, v_s):
    B, T, N, F = x.shape

    # Layout plumbing (cheap one-time ops on small operands):
    #   x -> (T, F, B*N): batch fused, lane axis = B*N (densest available here).
    #   W_1 flattened for SMEM, W_2 / v_s pre-transposed, b_s singleton dropped.
    x2 = jnp.transpose(x, (1, 3, 0, 2)).reshape(T, F, B * N)
    w1_s = W_1.reshape(T)
    w2_t = W_2.T                          # (T, F)
    bs2d = b_s.reshape(N, N)
    vs_t = v_s.T                          # (N, N)

    flops = (3 * 2 * B * N * F * T          # lhs1, rhs, W_2 projection
             + 2 * B * N * N * T            # product
             + 2 * B * N * N * N            # v_s application
             + 4 * B * N * N)               # softmax elementwise
    transcendentals = 3 * B * N * N         # sigmoid + exp (+ reciprocal)
    bytes_accessed = 4 * (B * T * N * F + T + T * F + F + 2 * N * N + B * N * N)

    return pl.pallas_call(
        spatial_attention_kernel,
        out_shape=jax.ShapeDtypeStruct((B, N, N), x.dtype),
        in_specs=[
            pl.BlockSpec(memory_space=pltpu.MemorySpace.SMEM),   # W_1 scalars
            pl.BlockSpec(memory_space=pltpu.MemorySpace.VMEM),   # x (T, F, B*N)
            pl.BlockSpec(memory_space=pltpu.MemorySpace.VMEM),   # W_2.T
            pl.BlockSpec(memory_space=pltpu.MemorySpace.VMEM),   # W_3
            pl.BlockSpec(memory_space=pltpu.MemorySpace.VMEM),   # b_s
            pl.BlockSpec(memory_space=pltpu.MemorySpace.VMEM),   # v_s.T
        ],
        out_specs=pl.BlockSpec(memory_space=pltpu.MemorySpace.VMEM),
        cost_estimate=pl.CostEstimate(
            flops=flops,
            transcendentals=transcendentals,
            bytes_accessed=bytes_accessed),
    )(w1_s, x2, w2_t, W_3, bs2d, vs_t)


def spatial_attention_ref(x, W_1, W_2, W_3, b_s, v_s):
    # Pure-JAX mirror of the PyTorch forward (verification only).
    B, T, N, F = x.shape
    lhs = jnp.matmul(jnp.transpose(x, (0, 2, 3, 1)), W_1).reshape(B, N, F)
    lhs = jnp.matmul(lhs, W_2)                              # (B, N, T)
    rhs = jnp.einsum("f,btnf->btn", W_3[:, 0], x)           # (B, T, N)
    product = jnp.matmul(lhs, rhs)                          # (B, N, N)
    sig = jax.nn.sigmoid(product + b_s)
    s = jnp.einsum("jk,bik->bij", v_s, sig)                 # (B, N, N)
    s = s - jnp.max(s, axis=1, keepdims=True)
    e = jnp.exp(s)
    return e / jnp.sum(e, axis=1, keepdims=True)


def xavier_uniform(key, shape, gain=1.414):
    # Deterministic xavier_uniform_ equivalent (torch fan conventions).
    if len(shape) == 2:
        fan_in, fan_out = shape[1], shape[0]
    else:
        rf = math.prod(shape[2:])
        fan_in, fan_out = shape[1] * rf, shape[0] * rf
    bound = gain * math.sqrt(6.0 / (fan_in + fan_out))
    return jax.random.uniform(key, shape, jnp.float32, -bound, bound)


if __name__ == "__main__":
    B, T, N, F = 2, 8, 16, 4  # batch, timesteps, vertices, features

    key = jax.random.PRNGKey(0)
    kx, k1, k2, k3, kb, kv = jax.random.split(key, 6)

    x = jax.random.normal(kx, (B, T, N, F), dtype=jnp.float32)
    W_1 = xavier_uniform(k1, (T, 1))
    W_2 = xavier_uniform(k2, (F, T))
    W_3 = xavier_uniform(k3, (F, 1))
    b_s = xavier_uniform(kb, (1, N, N))
    v_s = xavier_uniform(kv, (N, N))

    out = spatial_attention(x, W_1, W_2, W_3, b_s, v_s)
    out = jax.block_until_ready(out)

    ref = spatial_attention_ref(x, W_1, W_2, W_3, b_s, v_s)
    assert out.shape == (B, N, N)
    assert jnp.allclose(out, ref, atol=1e-5, rtol=1e-5), "mismatch vs reference"

    print("KERNEL_OK")
</pallas_src>

<mosaic_0001>
module attributes {stable_mosaic.version = 11 : i64} {
  func.func @spatial_attention_kernel(%arg0: memref<8xf32, #tpu.memory_space<smem>>, %arg1: memref<8x4x32xf32, #tpu.memory_space<vmem>>, %arg2: memref<8x4xf32, #tpu.memory_space<vmem>>, %arg3: memref<4x1xf32, #tpu.memory_space<vmem>>, %arg4: memref<16x16xf32, #tpu.memory_space<vmem>>, %arg5: memref<16x16xf32, #tpu.memory_space<vmem>>, %arg6: memref<2x16x16xf32, #tpu.memory_space<vmem>>) attributes {dimension_semantics = [], scalar_prefetch = 0 : i64, scratch_operands = 0 : i64, tpu.core_type = #tpu.core_type<tc>} {
    %c0 = arith.constant 0 : index
    %c0_0 = arith.constant 0 : index
    %c0_1 = arith.constant 0 : index
    %0 = vector.load %arg1[%c0, %c0_0, %c0_1] : memref<8x4x32xf32, #tpu.memory_space<vmem>>, vector<8x4x32xf32>
    %c0_2 = arith.constant 0 : index
    %c0_3 = arith.constant 0 : index
    %1 = vector.load %arg3[%c0_2, %c0_3] : memref<4x1xf32, #tpu.memory_space<vmem>>, vector<4x1xf32>
    %2 = vector.shape_cast %1 : vector<4x1xf32> to vector<1x4x1xf32>
    %3 = vector.broadcast %2 : vector<1x4x1xf32> to vector<8x4x32xf32>
    %4 = arith.mulf %0, %3 : vector<8x4x32xf32>
    %cst = arith.constant dense<0.000000e+00> : vector<8x32xf32>
    %5 = vector.multi_reduction <add>, %4, %cst [1] : vector<8x4x32xf32> to vector<8x32xf32>
    %c0_4 = arith.constant 0 : index
    %6 = memref.load %arg0[%c0_4] : memref<8xf32, #tpu.memory_space<smem>>
    %7 = vector.extract_strided_slice %0 {offsets = [0, 0, 0], sizes = [1, 4, 32], strides = [1, 1, 1]} : vector<8x4x32xf32> to vector<1x4x32xf32>
    %8 = vector.shape_cast %7 : vector<1x4x32xf32> to vector<4x32xf32>
    %9 = vector.broadcast %6 : f32 to vector<4x32xf32>
    %10 = arith.mulf %9, %8 : vector<4x32xf32>
    %c1 = arith.constant 1 : index
    %11 = memref.load %arg0[%c1] : memref<8xf32, #tpu.memory_space<smem>>
    %12 = vector.extract_strided_slice %0 {offsets = [1, 0, 0], sizes = [1, 4, 32], strides = [1, 1, 1]} : vector<8x4x32xf32> to vector<1x4x32xf32>
    %13 = vector.shape_cast %12 : vector<1x4x32xf32> to vector<4x32xf32>
    %14 = vector.broadcast %11 : f32 to vector<4x32xf32>
    %15 = arith.mulf %14, %13 : vector<4x32xf32>
    %16 = arith.addf %10, %15 : vector<4x32xf32>
    %c2 = arith.constant 2 : index
    %17 = memref.load %arg0[%c2] : memref<8xf32, #tpu.memory_space<smem>>
    %18 = vector.extract_strided_slice %0 {offsets = [2, 0, 0], sizes = [1, 4, 32], strides = [1, 1, 1]} : vector<8x4x32xf32> to vector<1x4x32xf32>
    %19 = vector.shape_cast %18 : vector<1x4x32xf32> to vector<4x32xf32>
    %20 = vector.broadcast %17 : f32 to vector<4x32xf32>
    %21 = arith.mulf %20, %19 : vector<4x32xf32>
    %22 = arith.addf %16, %21 : vector<4x32xf32>
    %c3 = arith.constant 3 : index
    %23 = memref.load %arg0[%c3] : memref<8xf32, #tpu.memory_space<smem>>
    %24 = vector.extract_strided_slice %0 {offsets = [3, 0, 0], sizes = [1, 4, 32], strides = [1, 1, 1]} : vector<8x4x32xf32> to vector<1x4x32xf32>
    %25 = vector.shape_cast %24 : vector<1x4x32xf32> to vector<4x32xf32>
    %26 = vector.broadcast %23 : f32 to vector<4x32xf32>
    %27 = arith.mulf %26, %25 : vector<4x32xf32>
    %28 = arith.addf %22, %27 : vector<4x32xf32>
    %c4 = arith.constant 4 : index
    %29 = memref.load %arg0[%c4] : memref<8xf32, #tpu.memory_space<smem>>
    %30 = vector.extract_strided_slice %0 {offsets = [4, 0, 0], sizes = [1, 4, 32], strides = [1, 1, 1]} : vector<8x4x32xf32> to vector<1x4x32xf32>
    %31 = vector.shape_cast %30 : vector<1x4x32xf32> to vector<4x32xf32>
    %32 = vector.broadcast %29 : f32 to vector<4x32xf32>
    %33 = arith.mulf %32, %31 : vector<4x32xf32>
    %34 = arith.addf %28, %33 : vector<4x32xf32>
    %c5 = arith.constant 5 : index
    %35 = memref.load %arg0[%c5] : memref<8xf32, #tpu.memory_space<smem>>
    %36 = vector.extract_strided_slice %0 {offsets = [5, 0, 0], sizes = [1, 4, 32], strides = [1, 1, 1]} : vector<8x4x32xf32> to vector<1x4x32xf32>
    %37 = vector.shape_cast %36 : vector<1x4x32xf32> to vector<4x32xf32>
    %38 = vector.broadcast %35 : f32 to vector<4x32xf32>
    %39 = arith.mulf %38, %37 : vector<4x32xf32>
    %40 = arith.addf %34, %39 : vector<4x32xf32>
    %c6 = arith.constant 6 : index
    %41 = memref.load %arg0[%c6] : memref<8xf32, #tpu.memory_space<smem>>
    %42 = vector.extract_strided_slice %0 {offsets = [6, 0, 0], sizes = [1, 4, 32], strides = [1, 1, 1]} : vector<8x4x32xf32> to vector<1x4x32xf32>
    %43 = vector.shape_cast %42 : vector<1x4x32xf32> to vector<4x32xf32>
    %44 = vector.broadcast %41 : f32 to vector<4x32xf32>
    %45 = arith.mulf %44, %43 : vector<4x32xf32>
    %46 = arith.addf %40, %45 : vector<4x32xf32>
    %c7 = arith.constant 7 : index
    %47 = memref.load %arg0[%c7] : memref<8xf32, #tpu.memory_space<smem>>
    %48 = vector.extract_strided_slice %0 {offsets = [7, 0, 0], sizes = [1, 4, 32], strides = [1, 1, 1]} : vector<8x4x32xf32> to vector<1x4x32xf32>
    %49 = vector.shape_cast %48 : vector<1x4x32xf32> to vector<4x32xf32>
    %50 = vector.broadcast %47 : f32 to vector<4x32xf32>
    %51 = arith.mulf %50, %49 : vector<4x32xf32>
    %52 = arith.addf %46, %51 : vector<4x32xf32>
    %c0_5 = arith.constant 0 : index
    %c0_6 = arith.constant 0 : index
    %53 = vector.load %arg2[%c0_5, %c0_6] : memref<8x4xf32, #tpu.memory_space<vmem>>, vector<8x4xf32>
    %cst_7 = arith.constant dense<0.000000e+00> : vector<8x32xf32>
    %54 = tpu.matmul %53, %52, %cst_7 {dimension_numbers = #tpu.dot_dimension_numbers<[1], [0], [0], [1], [0, 0, 1, 1], [], []>} : vector<8x4xf32>, vector<4x32xf32>, vector<8x32xf32> -> vector<8x32xf32>
    %c0_8 = arith.constant 0 : index
    %c0_9 = arith.constant 0 : index
    %55 = vector.load %arg4[%c0_8, %c0_9] : memref<16x16xf32, #tpu.memory_space<vmem>>, vector<16x16xf32>
    %c0_10 = arith.constant 0 : index
    %c0_11 = arith.constant 0 : index
    %56 = vector.load %arg5[%c0_10, %c0_11] : memref<16x16xf32, #tpu.memory_space<vmem>>, vector<16x16xf32>
    %57 = vector.extract_strided_slice %54 {offsets = [0, 0], sizes = [8, 16], strides = [1, 1]} : vector<8x32xf32> to vector<8x16xf32>
    %58 = vector.extract_strided_slice %5 {offsets = [0, 0], sizes = [8, 16], strides = [1, 1]} : vector<8x32xf32> to vector<8x16xf32>
    %cst_12 = arith.constant dense<0.000000e+00> : vector<16x16xf32>
    %59 = tpu.matmul %57, %58, %cst_12 {dimension_numbers = #tpu.dot_dimension_numbers<[0], [0], [1], [1], [0, 1, 1, 1], [], []>} : vector<8x16xf32>, vector<8x16xf32>, vector<16x16xf32> -> vector<16x16xf32>
    %60 = arith.addf %59, %55 : vector<16x16xf32>
    %61 = arith.negf %60 : vector<16x16xf32>
    %62 = math.exp %61 : vector<16x16xf32>
    %cst_13 = arith.constant 1.000000e+00 : f32
    %63 = vector.broadcast %cst_13 : f32 to vector<16x16xf32>
    %64 = arith.addf %63, %62 : vector<16x16xf32>
    %65 = arith.divf %63, %64 : vector<16x16xf32>
    %cst_14 = arith.constant dense<0.000000e+00> : vector<16x16xf32>
    %66 = tpu.matmul %65, %56, %cst_14 {dimension_numbers = #tpu.dot_dimension_numbers<[1], [0], [0], [1], [0, 0, 1, 1], [], []>} : vector<16x16xf32>, vector<16x16xf32>, vector<16x16xf32> -> vector<16x16xf32>
    %cst_15 = arith.constant dense<0xFF800000> : vector<16xf32>
    %67 = vector.multi_reduction <maximumf>, %66, %cst_15 [0] : vector<16x16xf32> to vector<16xf32>
    %68 = vector.shape_cast %67 : vector<16xf32> to vector<1x16xf32>
    %69 = vector.broadcast %68 : vector<1x16xf32> to vector<16x16xf32>
    %70 = arith.subf %66, %69 : vector<16x16xf32>
    %71 = math.exp %70 : vector<16x16xf32>
    %cst_16 = arith.constant dense<0.000000e+00> : vector<16xf32>
    %72 = vector.multi_reduction <add>, %71, %cst_16 [0] : vector<16x16xf32> to vector<16xf32>
    %73 = vector.shape_cast %72 : vector<16xf32> to vector<1x16xf32>
    %74 = tpu.reciprocal %73 : vector<1x16xf32> -> vector<1x16xf32>
    %75 = vector.broadcast %74 : vector<1x16xf32> to vector<16x16xf32>
    %76 = arith.mulf %71, %75 : vector<16x16xf32>
    %c0_17 = arith.constant 0 : index
    %c0_18 = arith.constant 0 : index
    %c0_19 = arith.constant 0 : index
    %77 = vector.load %arg6[%c0_17, %c0_18, %c0_19] : memref<2x16x16xf32, #tpu.memory_space<vmem>>, vector<1x16x16xf32>
    %78 = vector.shape_cast %77 : vector<1x16x16xf32> to vector<16x16xf32>
    %79 = vector.shape_cast %76 : vector<16x16xf32> to vector<1x16x16xf32>
    tpu.vector_store %arg6[%c0_17, %c0_18, %c0_19], %79 {strides = array<i32>} : memref<2x16x16xf32, #tpu.memory_space<vmem>>, vector<1x16x16xf32>,
    %80 = vector.extract_strided_slice %54 {offsets = [0, 16], sizes = [8, 16], strides = [1, 1]} : vector<8x32xf32> to vector<8x16xf32>
    %81 = vector.extract_strided_slice %5 {offsets = [0, 16], sizes = [8, 16], strides = [1, 1]} : vector<8x32xf32> to vector<8x16xf32>
    %cst_20 = arith.constant dense<0.000000e+00> : vector<16x16xf32>
    %82 = tpu.matmul %80, %81, %cst_20 {dimension_numbers = #tpu.dot_dimension_numbers<[0], [0], [1], [1], [0, 1, 1, 1], [], []>} : vector<8x16xf32>, vector<8x16xf32>, vector<16x16xf32> -> vector<16x16xf32>
    %83 = arith.addf %82, %55 : vector<16x16xf32>
    %84 = arith.negf %83 : vector<16x16xf32>
    %85 = math.exp %84 : vector<16x16xf32>
    %cst_21 = arith.constant 1.000000e+00 : f32
    %86 = vector.broadcast %cst_21 : f32 to vector<16x16xf32>
    %87 = arith.addf %86, %85 : vector<16x16xf32>
    %88 = arith.divf %86, %87 : vector<16x16xf32>
    %cst_22 = arith.constant dense<0.000000e+00> : vector<16x16xf32>
    %89 = tpu.matmul %88, %56, %cst_22 {dimension_numbers = #tpu.dot_dimension_numbers<[1], [0], [0], [1], [0, 0, 1, 1], [], []>} : vector<16x16xf32>, vector<16x16xf32>, vector<16x16xf32> -> vector<16x16xf32>
    %cst_23 = arith.constant dense<0xFF800000> : vector<16xf32>
    %90 = vector.multi_reduction <maximumf>, %89, %cst_23 [0] : vector<16x16xf32> to vector<16xf32>
    %91 = vector.shape_cast %90 : vector<16xf32> to vector<1x16xf32>
    %92 = vector.broadcast %91 : vector<1x16xf32> to vector<16x16xf32>
    %93 = arith.subf %89, %92 : vector<16x16xf32>
    %94 = math.exp %93 : vector<16x16xf32>
    %cst_24 = arith.constant dense<0.000000e+00> : vector<16xf32>
    %95 = vector.multi_reduction <add>, %94, %cst_24 [0] : vector<16x16xf32> to vector<16xf32>
    %96 = vector.shape_cast %95 : vector<16xf32> to vector<1x16xf32>
    %97 = tpu.reciprocal %96 : vector<1x16xf32> -> vector<1x16xf32>
    %98 = vector.broadcast %97 : vector<1x16xf32> to vector<16x16xf32>
    %99 = arith.mulf %94, %98 : vector<16x16xf32>
    %c1_25 = arith.constant 1 : index
    %c0_26 = arith.constant 0 : index
    %c0_27 = arith.constant 0 : index
    %100 = vector.load %arg6[%c1_25, %c0_26, %c0_27] : memref<2x16x16xf32, #tpu.memory_space<vmem>>, vector<1x16x16xf32>
    %101 = vector.shape_cast %100 : vector<1x16x16xf32> to vector<16x16xf32>
    %102 = vector.shape_cast %99 : vector<16x16xf32> to vector<1x16x16xf32>
    tpu.vector_store %arg6[%c1_25, %c0_26, %c0_27], %102 {strides = array<i32>} : memref<2x16x16xf32, #tpu.memory_space<vmem>>, vector<1x16x16xf32>,
    return
  }
}

</mosaic_0001>

<llo_original>
// kernel: tpu_custom_call.1
$region0: #{tpu_custom_call.1}
  #allocation0 [shape = 'u32[]', space=smem, size = 0x4, offset = 0x4, fixed_abs, tag = 'smem constant byte address 0x4 - core index']
  #allocation1 [shape = 'u32[144,128]{1,0:T(1,128)}', space=vmem, size = 0x12000, scoped, tag = 'internal scratch']
  %s0 = inlined_call_operand.hbm [shape: f32[8], index: 0, kind: input, shape index: {}]
  %s1 = inlined_call_operand.hbm [shape: f32[8,4,32], index: 1, kind: input, shape index: {}]
  %s2 = inlined_call_operand.vmem [shape: f32[8,4], index: 2, kind: input, shape index: {}]
  %s3 = inlined_call_operand.vmem [shape: f32[4,1], index: 3, kind: input, shape index: {}]
  %s4 = inlined_call_operand.vmem [shape: f32[16,16], index: 4, kind: input, shape index: {}]
  %s5 = inlined_call_operand.vmem [shape: f32[16,16], index: 5, kind: input, shape index: {}]
  %s6 = inlined_call_operand.hbm [shape: f32[2,16,16], index: 6, kind: output, shape index: {}]
  %s7 = sld [smem:[#allocation0]]
  $region42: #{tpu_custom_call.1} parent=0
    _
  %s9 = ssub.s32 1, %s7
  %s10 = scalar_select 0, %s9, %s7
  $region1: #{tpu_custom_call.1} parent=0
    #allocation2 [shape = 'u8[512]{0}', space=smem, size = 0x200, scoped, tag = 'input window, operand 0, single buffered']
    #allocation3 [shape = 's32[1]{0}', space=sflag, size = 0x4, scoped, tag = 'scoped memory for tpu_custom_call.1']
    #allocation4 [shape = 's32[1]{0}', space=sflag, size = 0x4, scoped, tag = 'scoped memory for tpu_custom_call.1']
    #allocation5 [shape = 's32[1]{0}', space=sflag, size = 0x4, scoped, tag = 'scoped memory for tpu_custom_call.1']
    #allocation6 [shape = 'u8[16384]{0}', space=vmem, size = 0x4000, scoped, tag = 'input window, operand 1, single buffered']
    #allocation7 [shape = 'u8[16384]{0}', space=vmem, size = 0x4000, scoped, tag = 'output window, operand 0, single buffered']
    %11 = vsyncpa [#allocation5], 0
    %12 = vsyncpa [#allocation3], 0
    %13 = vsyncpa [#allocation4], 0
    // Predicated region
    $region2: #{tpu_custom_call.1} parent=1 // pred_check
      _
    $region3: #{tpu_custom_call.1} parent=1 // pred_check_branch
      %15 = sbr.rel (0) target = $region5
    $region4: #{tpu_custom_call.1} parent=1 // pred_region
      %s17 = ssub.s32 16, 16
      %18 = vsyncadd [#allocation5], %s17
      %21 = dma.hbm_to_smem %s0, 16, [#allocation2], [#allocation5]
    $region5: #{tpu_custom_call.1} parent=1 // pred_fallthru
      _
    // Predicated region
    $region6: #{tpu_custom_call.1} parent=1 // pred_check
      _
    $region7: #{tpu_custom_call.1} parent=1 // pred_check_branch
      %23 = sbr.rel (0) target = $region9
    $region8: #{tpu_custom_call.1} parent=1 // pred_region
      %s25 = ssub.s32 512, 512
      %26 = vsyncadd [#allocation3], %s25
      %s27 = sshll.u32 [#allocation6], 4
      %s28 = int_to_ptr.vmem [resolvable:$true] %s27
      %33 = dma.hbm_to_vmem [thread:$0]  %s1, 512, %s28, [#allocation3], 64, 64, 4
    $region9: #{tpu_custom_call.1} parent=1 // pred_fallthru
      _
    // Predicated region
    $region10: #{tpu_custom_call.1} parent=1 // pred_check
      _
    $region11: #{tpu_custom_call.1} parent=1 // pred_check_branch
      %35 = sbr.rel (0) target = $region13
    $region12: #{tpu_custom_call.1} parent=1 // pred_region
      _
    $region13: #{tpu_custom_call.1} parent=1 // pred_fallthru
      _
    // Predicated region
    $region14: #{tpu_custom_call.1} parent=1 // pred_check
      _
    $region15: #{tpu_custom_call.1} parent=1 // pred_check_branch
      %37 = sbr.rel (0) target = $region17
    $region16: #{tpu_custom_call.1} parent=1 // pred_region
      _
    $region17: #{tpu_custom_call.1} parent=1 // pred_fallthru
      _
    // Predicated region
    $region18: #{tpu_custom_call.1} parent=1 // pred_check
      _
    $region19: #{tpu_custom_call.1} parent=1 // pred_check_branch
      %39 = sbr.rel (0) target = $region21
    $region20: #{tpu_custom_call.1} parent=1 // pred_region
      _
    $region21: #{tpu_custom_call.1} parent=1 // pred_fallthru
      _
    // Predicated region
    $region22: #{tpu_custom_call.1} parent=1 // pred_check
      _
    $region23: #{tpu_custom_call.1} parent=1 // pred_check_branch
      %41 = sbr.rel (0) target = $region25
    $region24: #{tpu_custom_call.1} parent=1 // pred_region
      _
    $region25: #{tpu_custom_call.1} parent=1 // pred_fallthru
      _
    // Predicated region
    $region26: #{tpu_custom_call.1} parent=1 // pred_check
      _
    $region27: #{tpu_custom_call.1} parent=1 // pred_check_branch
      %43 = sbr.rel (0) target = $region29
    $region28: #{tpu_custom_call.1} parent=1 // pred_region
      %44 = dma.done [#allocation5], 16
    $region29: #{tpu_custom_call.1} parent=1 // pred_fallthru
      _
    // Predicated region
    $region30: #{tpu_custom_call.1} parent=1 // pred_check
      _
    $region31: #{tpu_custom_call.1} parent=1 // pred_check_branch
      %46 = sbr.rel (0) target = $region33
    $region32: #{tpu_custom_call.1} parent=1 // pred_region
      %47 = dma.done [#allocation3], 512
    $region33: #{tpu_custom_call.1} parent=1 // pred_fallthru
      _
    %48 = sfence
    %v49 = vld [vmem:[#allocation6] sm:$0xf]
    %v50 = vld [vmem:[#allocation6 + $0x4] sm:$0xf]
    %v51 = vld [vmem:[#allocation6 + $0x8] sm:$0xf]
    %v52 = vld [vmem:[#allocation6 + $0xc] sm:$0xf]
    %v53 = vld [vmem:[#allocation6 + $0x10] sm:$0xf]
    %v54 = vld [vmem:[#allocation6 + $0x14] sm:$0xf]
    %v55 = vld [vmem:[#allocation6 + $0x18] sm:$0xf]
    %v56 = vld [vmem:[#allocation6 + $0x1c] sm:$0xf]
    %v57 = vld [vmem:[%s3] sm:$0xf]
    %59 = vset.pattern.permute.xlu0 0
    %60 = vperm.xlu0 %59, %v57
    %v61 = vpop.permute.xlu0 %60
    %v63 = vmul.f32 %v49, %v61
    %v64 = vmul.f32 %v50, %v61
    %v65 = vmul.f32 %v51, %v61
    %v66 = vmul.f32 %v52, %v61
    %v67 = vmul.f32 %v53, %v61
    %v68 = vmul.f32 %v54, %v61
    %v69 = vmul.f32 %v55, %v61
    %v70 = vmul.f32 %v56, %v61
    %vm71 = vcmask 257024
    %v72 = vsel %vm71, %v63, 0.0
    %v73 = vrot.slane %v72, 4
    %v74 = vadd.f32 %v72, %v73
    %v75 = vrot.slane %v74, 2
    %v76 = vadd.f32 %v74, %v75
    %v77 = vrot.slane %v76, 1
    %v78 = vadd.f32 %v76, %v77
    %v79 = vsel %vm71, %v64, 0.0
    %v80 = vrot.slane %v79, 4
    %v81 = vadd.f32 %v79, %v80
    %v82 = vrot.slane %v81, 2
    %v83 = vadd.f32 %v81, %v82
    %v84 = vrot.slane %v83, 1
    %v85 = vadd.f32 %v83, %v84
    %v86 = vsel %vm71, %v65, 0.0
    %v87 = vrot.slane %v86, 4
    %v88 = vadd.f32 %v86, %v87
    %v89 = vrot.slane %v88, 2
    %v90 = vadd.f32 %v88, %v89
    %v91 = vrot.slane %v90, 1
    %v92 = vadd.f32 %v90, %v91
    %v93 = vsel %vm71, %v66, 0.0
    %v94 = vrot.slane %v93, 4
    %v95 = vadd.f32 %v93, %v94
    %v96 = vrot.slane %v95, 2
    %v97 = vadd.f32 %v95, %v96
    %v98 = vrot.slane %v97, 1
    %v99 = vadd.f32 %v97, %v98
    %v100 = vsel %vm71, %v67, 0.0
    %v101 = vrot.slane %v100, 4
    %v102 = vadd.f32 %v100, %v101
    %v103 = vrot.slane %v102, 2
    %v104 = vadd.f32 %v102, %v103
    %v105 = vrot.slane %v104, 1
    %v106 = vadd.f32 %v104, %v105
    %v107 = vsel %vm71, %v68, 0.0
    %v108 = vrot.slane %v107, 4
    %v109 = vadd.f32 %v107, %v108
    %v110 = vrot.slane %v109, 2
    %v111 = vadd.f32 %v109, %v110
    %v112 = vrot.slane %v111, 1
    %v113 = vadd.f32 %v111, %v112
    %v114 = vsel %vm71, %v69, 0.0
    %v115 = vrot.slane %v114, 4
    %v116 = vadd.f32 %v114, %v115
    %v117 = vrot.slane %v116, 2
    %v118 = vadd.f32 %v116, %v117
    %v119 = vrot.slane %v118, 1
    %v120 = vadd.f32 %v118, %v119
    %v121 = vsel %vm71, %v70, 0.0
    %v122 = vrot.slane %v121, 4
    %v123 = vadd.f32 %v121, %v122
    %v124 = vrot.slane %v123, 2
    %v125 = vadd.f32 %v123, %v124
    %v126 = vrot.slane %v125, 1
    %v127 = vadd.f32 %v125, %v126
    %s128 = sld [smem:[#allocation2]]
    %v129 = vstv %s128
    %v130 = vmul.f32 %v129, %v49
    %s131 = sld [smem:[#allocation2 + $0x1]]
    %v132 = vstv %s131
    %v133 = vmul.f32 %v132, %v50
    %v134 = vadd.f32 %v130, %v133
    %s135 = sld [smem:[#allocation2 + $0x2]]
    %v136 = vstv %s135
    %v137 = vmul.f32 %v136, %v51
    %v138 = vadd.f32 %v134, %v137
    %s139 = sld [smem:[#allocation2 + $0x3]]
    %v140 = vstv %s139
    %v141 = vmul.f32 %v140, %v52
    %v142 = vadd.f32 %v138, %v141
    %s143 = sld [smem:[#allocation2 + $0x4]]
    %v144 = vstv %s143
    %v145 = vmul.f32 %v144, %v53
    %v146 = vadd.f32 %v142, %v145
    %s147 = sld [smem:[#allocation2 + $0x5]]
    %v148 = vstv %s147
    %v149 = vmul.f32 %v148, %v54
    %v150 = vadd.f32 %v146, %v149
    %s151 = sld [smem:[#allocation2 + $0x6]]
    %v152 = vstv %s151
    %v153 = vmul.f32 %v152, %v55
    %v154 = vadd.f32 %v150, %v153
    %s155 = sld [smem:[#allocation2 + $0x7]]
    %v156 = vstv %s155
    %v157 = vmul.f32 %v156, %v56
    %v158 = vadd.f32 %v154, %v157
    %v159 = vld [vmem:[%s2] sm:$0xff]
    %vm160 = vcmask 31744
    %v162 = vsel %vm160, %v159, 0
    %vm164 = vcmask 1043456
    %v166 = vsel %vm164, %v158, 0
    %168 = vmatprep.subr.mxu0 0.0
    %169 = vmatpush1.msra.mxu0 %v166
    %170 = vmatprep.subr.mxu0 0.0
    %171 = vmatpush1.msra.mxu0 0.0
    %172 = vmatprep.subr.mxu0 0.0
    %173 = vmatpush1.msra.mxu0 0.0
    %174 = vmatprep.subr.mxu0 0.0
    %175 = vmatpush1.msra.mxu0 0.0
    %176 = vmatprep.subr.mxu0 0.0
    %177 = vmatpush1.msra.mxu0 0.0
    %178 = vmatprep.subr.mxu0 0.0
    %179 = vmatpush1.msra.mxu0 0.0
    %180 = vmatprep.subr.mxu0 0.0
    %181 = vmatpush1.msra.mxu0 0.0
    %182 = vmatprep.subr.mxu0 0.0
    %183 = vmatpush1.msra.mxu0 0.0
    %184 = vmatprep.subr.mxu0 0.0
    %185 = vmatpush1.msra.mxu0 0.0
    %186 = vmatprep.subr.mxu0 0.0
    %187 = vmatpush1.msra.mxu0 0.0
    %188 = vmatprep.subr.mxu0 0.0
    %189 = vmatpush1.msra.mxu0 0.0
    %190 = vmatprep.subr.mxu0 0.0
    %191 = vmatpush1.msra.mxu0 0.0
    %192 = vmatprep.subr.mxu0 0.0
    %193 = vmatpush1.msra.mxu0 0.0
    %194 = vmatprep.subr.mxu0 0.0
    %195 = vmatpush1.msra.mxu0 0.0
    %196 = vmatprep.subr.mxu0 0.0
    %197 = vmatpush1.msra.mxu0 0.0
    %198 = vmatprep.subr.mxu0 0.0
    %199 = vmatpush1.msra.mxu0 0.0
    %200 = vmatprep.subr.mxu0 0.0
    %201 = vmatpush1.msra.mxu0 0.0
    %202 = vmatprep.subr.mxu0 0.0
    %203 = vmatpush1.msra.mxu0 0.0
    %204 = vmatprep.subr.mxu0 0.0
    %205 = vmatpush1.msra.mxu0 0.0
    %206 = vmatprep.subr.mxu0 0.0
    %207 = vmatpush1.msra.mxu0 0.0
    %208 = vmatprep.subr.mxu0 0.0
    %209 = vmatpush1.msra.mxu0 0.0
    %210 = vmatprep.subr.mxu0 0.0
    %211 = vmatpush1.msra.mxu0 0.0
    %212 = vmatprep.subr.mxu0 0.0
    %213 = vmatpush1.msra.mxu0 0.0
    %214 = vmatprep.subr.mxu0 0.0
    %215 = vmatpush1.msra.mxu0 0.0
    %216 = vmatprep.subr.mxu0 0.0
    %217 = vmatpush1.msra.mxu0 0.0
    %218 = vmatprep.subr.mxu0 0.0
    %219 = vmatpush1.msra.mxu0 0.0
    %220 = vmatprep.subr.mxu0 0.0
    %221 = vmatpush1.msra.mxu0 0.0
    %222 = vmatprep.subr.mxu0 0.0
    %223 = vmatpush1.msra.mxu0 0.0
    %224 = vmatprep.subr.mxu0 0.0
    %225 = vmatpush1.msra.mxu0 0.0
    %226 = vmatprep.subr.mxu0 0.0
    %227 = vmatpush1.msra.mxu0 0.0
    %228 = vmatprep.subr.mxu0 0.0
    %229 = vmatpush1.msra.mxu0 0.0
    %230 = vmatprep.subr.mxu0 0.0
    %231 = vmatpush1.msra.mxu0 0.0
    %232 = vmatprep.mubr.f32.mxu0 0.0
    %233 = vmatmul.mubr.f32.gmra.mrb[0].mxu0 %v162
    %v234 = vpop.f32.mrb[0].mxu0
    %v235 = vadd.f32 0.0, %v234
    %v236 = vpop.f32.mrb[0].mxu0
    %237 = vdwg.mxu0
    %v238 = vld [vmem:[%s4] sm:$0xff]
    %v239 = vld [vmem:[%s4 + $0x8] sm:$0xff]
    %v240 = vld [vmem:[%s5] sm:$0xff]
    %v241 = vld [vmem:[%s5 + $0x8] sm:$0xff]
    %242 = vxpose.xlu0.b32.start [1/16] %v235, 128
    %243 = vxpose.xlu0.b32.cont [2/16] 0.0, 128
    %244 = vxpose.xlu0.b32.cont [3/16] 0.0, 128
    %245 = vxpose.xlu0.b32.cont [4/16] 0.0, 128
    %246 = vxpose.xlu0.b32.cont [5/16] 0.0, 128
    %247 = vxpose.xlu0.b32.cont [6/16] 0.0, 128
    %248 = vxpose.xlu0.b32.cont [7/16] 0.0, 128
    %249 = vxpose.xlu0.b32.cont [8/16] 0.0, 128
    %250 = vxpose.xlu0.b32.cont [9/16] 0.0, 128
    %251 = vxpose.xlu0.b32.cont [10/16] 0.0, 128
    %252 = vxpose.xlu0.b32.cont [11/16] 0.0, 128
    %253 = vxpose.xlu0.b32.cont [12/16] 0.0, 128
    %254 = vxpose.xlu0.b32.cont [13/16] 0.0, 128
    %255 = vxpose.xlu0.b32.cont [14/16] 0.0, 128
    %256 = vxpose.xlu0.b32.cont [15/16] 0.0, 128
    %257 = vxpose.xlu0.b32.end [16/16] 0.0, 128
    %v258 = vpop.trf.xlu0
    %v259 = vpop.trf.xlu0
    %v260 = vpop.trf.xlu0
    %v261 = vpop.trf.xlu0
    %v262 = vpop.trf.xlu0
    %v263 = vpop.trf.xlu0
    %v264 = vpop.trf.xlu0
    %v265 = vpop.trf.xlu0
    %v266 = vpop.trf.xlu0
    %v267 = vpop.trf.xlu0
    %v268 = vpop.trf.xlu0
    %v269 = vpop.trf.xlu0
    %v270 = vpop.trf.xlu0
    %v271 = vpop.trf.xlu0
    %v272 = vpop.trf.xlu0
    %v273 = vpop.trf.xlu0
    %vm282 = vcmask 1041409
    %v283 = vsel %vm282, %v85, %v78
    %vm284 = vcmask 1042434
    %v285 = vsel %vm284, %v92, %v283
    %vm286 = vcmask 1043459
    %v287 = vsel %vm286, %v99, %v285
    %vm288 = vcmask 1044484
    %v289 = vsel %vm288, %v106, %v287
    %vm290 = vcmask 1045509
    %v291 = vsel %vm290, %v113, %v289
    %vm292 = vcmask 1046534
    %v293 = vsel %vm292, %v120, %v291
    %vm294 = vcmask 1047559
    %v295 = vsel %vm294, %v127, %v293
    %vm297 = vcmask 64512
    %v299 = vsel %vm297, %v258, 0
    %v302 = vsel %vm297, %v259, 0
    %304 = vmatprep.subr.mxu0 0.0
    %305 = vmatpush1.msra.mxu0 %v295
    %306 = vmatprep.subr.mxu0 0.0
    %307 = vmatpush1.msra.mxu0 0.0
    %308 = vmatprep.subr.mxu0 0.0
    %309 = vmatpush1.msra.mxu0 0.0
    %310 = vmatprep.subr.mxu0 0.0
    %311 = vmatpush1.msra.mxu0 0.0
    %312 = vmatprep.subr.mxu0 0.0
    %313 = vmatpush1.msra.mxu0 0.0
    %314 = vmatprep.subr.mxu0 0.0
    %315 = vmatpush1.msra.mxu0 0.0
    %316 = vmatprep.subr.mxu0 0.0
    %317 = vmatpush1.msra.mxu0 0.0
    %318 = vmatprep.subr.mxu0 0.0
    %319 = vmatpush1.msra.mxu0 0.0
    %320 = vmatprep.subr.mxu0 0.0
    %321 = vmatpush1.msra.mxu0 0.0
    %322 = vmatprep.subr.mxu0 0.0
    %323 = vmatpush1.msra.mxu0 0.0
    %324 = vmatprep.subr.mxu0 0.0
    %325 = vmatpush1.msra.mxu0 0.0
    %326 = vmatprep.subr.mxu0 0.0
    %327 = vmatpush1.msra.mxu0 0.0
    %328 = vmatprep.subr.mxu0 0.0
    %329 = vmatpush1.msra.mxu0 0.0
    %330 = vmatprep.subr.mxu0 0.0
    %331 = vmatpush1.msra.mxu0 0.0
    %332 = vmatprep.subr.mxu0 0.0
    %333 = vmatpush1.msra.mxu0 0.0
    %334 = vmatprep.subr.mxu0 0.0
    %335 = vmatpush1.msra.mxu0 0.0
    %336 = vmatprep.subr.mxu0 0.0
    %337 = vmatpush1.msra.mxu0 0.0
    %338 = vmatprep.subr.mxu0 0.0
    %339 = vmatpush1.msra.mxu0 0.0
    %340 = vmatprep.subr.mxu0 0.0
    %341 = vmatpush1.msra.mxu0 0.0
    %342 = vmatprep.subr.mxu0 0.0
    %343 = vmatpush1.msra.mxu0 0.0
    %344 = vmatprep.subr.mxu0 0.0
    %345 = vmatpush1.msra.mxu0 0.0
    %346 = vmatprep.subr.mxu0 0.0
    %347 = vmatpush1.msra.mxu0 0.0
    %348 = vmatprep.subr.mxu0 0.0
    %349 = vmatpush1.msra.mxu0 0.0
    %350 = vmatprep.subr.mxu0 0.0
    %351 = vmatpush1.msra.mxu0 0.0
    %352 = vmatprep.subr.mxu0 0.0
    %353 = vmatpush1.msra.mxu0 0.0
    %354 = vmatprep.subr.mxu0 0.0
    %355 = vmatpush1.msra.mxu0 0.0
    %356 = vmatprep.subr.mxu0 0.0
    %357 = vmatpush1.msra.mxu0 0.0
    %358 = vmatprep.subr.mxu0 0.0
    %359 = vmatpush1.msra.mxu0 0.0
    %360 = vmatprep.subr.mxu0 0.0
    %361 = vmatpush1.msra.mxu0 0.0
    %362 = vmatprep.subr.mxu0 0.0
    %363 = vmatpush1.msra.mxu0 0.0
    %364 = vmatprep.subr.mxu0 0.0
    %365 = vmatpush1.msra.mxu0 0.0
    %366 = vmatprep.subr.mxu0 0.0
    %367 = vmatpush1.msra.mxu0 0.0
    %368 = vmatprep.mubr.f32.mxu0 0.0
    %369 = vmatmul.mubr.f32.gmra.mrb[0].mxu0 %v299
    %v370 = vpop.f32.mrb[0].mxu0
    %v371 = vadd.f32 %v238, %v370
    %v372 = vpop.f32.mrb[0].mxu0
    %373 = vmatprep.mubr.f32.mxu0 0.0
    %374 = vmatmul.mubr.f32.gmra.mrb[0].mxu0 %v302
    %v375 = vpop.f32.mrb[0].mxu0
    %v376 = vadd.f32 %v239, %v375
    %v377 = vpop.f32.mrb[0].mxu0
    %378 = vdwg.mxu0
    %v379 = vxor.u32 %v371, 2147483648
    %v380 = vxor.u32 %v376, 2147483648
    %v381 = vmul.f32 %v379, 1.442695
    %v382 = vpow.pop %v381
    %v383 = vmul.f32 %v380, 1.442695
    %v384 = vpow.pop %v383
    %v385 = vadd.f32 %v382, 1.0
    %v386 = vadd.f32 %v384, 1.0
    %v387 = vrcp.pop %v385
    %v388 = vmul.f32 1.0, %v387
    %v389 = vrcp.pop %v386
    %v390 = vmul.f32 1.0, %v389
    %vm391 = vcmask 130048
    %v393 = vsel %vm391, %v388, 0
    %v396 = vsel %vm391, %v390, 0
    %398 = vmatprep.subr.mxu0 0.0
    %399 = vmatpush1.msra.mxu0 %v240
    %400 = vmatprep.subr.mxu0 0.0
    %401 = vmatpush1.msra.mxu0 %v241
    %402 = vmatprep.subr.mxu0 0.0
    %403 = vmatpush1.msra.mxu0 0.0
    %404 = vmatprep.subr.mxu0 0.0
    %405 = vmatpush1.msra.mxu0 0.0
    %406 = vmatprep.subr.mxu0 0.0
    %407 = vmatpush1.msra.mxu0 0.0
    %408 = vmatprep.subr.mxu0 0.0
    %409 = vmatpush1.msra.mxu0 0.0
    %410 = vmatprep.subr.mxu0 0.0
    %411 = vmatpush1.msra.mxu0 0.0
    %412 = vmatprep.subr.mxu0 0.0
    %413 = vmatpush1.msra.mxu0 0.0
    %414 = vmatprep.subr.mxu0 0.0
    %415 = vmatpush1.msra.mxu0 0.0
    %416 = vmatprep.subr.mxu0 0.0
    %417 = vmatpush1.msra.mxu0 0.0
    %418 = vmatprep.subr.mxu0 0.0
    %419 = vmatpush1.msra.mxu0 0.0
    %420 = vmatprep.subr.mxu0 0.0
    %421 = vmatpush1.msra.mxu0 0.0
    %422 = vmatprep.subr.mxu0 0.0
    %423 = vmatpush1.msra.mxu0 0.0
    %424 = vmatprep.subr.mxu0 0.0
    %425 = vmatpush1.msra.mxu0 0.0
    %426 = vmatprep.subr.mxu0 0.0
    %427 = vmatpush1.msra.mxu0 0.0
    %428 = vmatprep.subr.mxu0 0.0
    %429 = vmatpush1.msra.mxu0 0.0
    %430 = vmatprep.subr.mxu0 0.0
    %431 = vmatpush1.msra.mxu0 0.0
    %432 = vmatprep.subr.mxu0 0.0
    %433 = vmatpush1.msra.mxu0 0.0
    %434 = vmatprep.subr.mxu0 0.0
    %435 = vmatpush1.msra.mxu0 0.0
    %436 = vmatprep.subr.mxu0 0.0
    %437 = vmatpush1.msra.mxu0 0.0
    %438 = vmatprep.subr.mxu0 0.0
    %439 = vmatpush1.msra.mxu0 0.0
    %440 = vmatprep.subr.mxu0 0.0
    %441 = vmatpush1.msra.mxu0 0.0
    %442 = vmatprep.subr.mxu0 0.0
    %443 = vmatpush1.msra.mxu0 0.0
    %444 = vmatprep.subr.mxu0 0.0
    %445 = vmatpush1.msra.mxu0 0.0
    %446 = vmatprep.subr.mxu0 0.0
    %447 = vmatpush1.msra.mxu0 0.0
    %448 = vmatprep.subr.mxu0 0.0
    %449 = vmatpush1.msra.mxu0 0.0
    %450 = vmatprep.subr.mxu0 0.0
    %451 = vmatpush1.msra.mxu0 0.0
    %452 = vmatprep.subr.mxu0 0.0
    %453 = vmatpush1.msra.mxu0 0.0
    %454 = vmatprep.subr.mxu0 0.0
    %455 = vmatpush1.msra.mxu0 0.0
    %456 = vmatprep.subr.mxu0 0.0
    %457 = vmatpush1.msra.mxu0 0.0
    %458 = vmatprep.subr.mxu0 0.0
    %459 = vmatpush1.msra.mxu0 0.0
    %460 = vmatprep.subr.mxu0 0.0
    %461 = vmatpush1.msra.mxu0 0.0
    %462 = vmatprep.mubr.f32.mxu0 0.0
    %463 = vmatmul.mubr.f32.gmra.mrb[0].mxu0 %v393
    %v464 = vpop.f32.mrb[0].mxu0
    %v465 = vadd.f32 0.0, %v464
    %v466 = vpop.f32.mrb[0].mxu0
    %467 = vmatprep.mubr.f32.mxu0 0.0
    %468 = vmatmul.mubr.f32.gmra.mrb[0].mxu0 %v396
    %v469 = vpop.f32.mrb[0].mxu0
    %v470 = vadd.f32 0.0, %v469
    %v471 = vpop.f32.mrb[0].mxu0
    %472 = vdwg.mxu0
    %v473 = vsel %vm391, %v465, -inf
    %v474 = vsel %vm391, %v470, -inf
    %v475 = vmax.f32 %v473, %v474
    %v476 = vrot.slane %v475, 4
    %v477 = vmax.f32 %v475, %v476
    %v478 = vrot.slane %v477, 2
    %v479 = vmax.f32 %v477, %v478
    %v480 = vrot.slane %v479, 1
    %v481 = vmax.f32 %v479, %v480
    %v482 = vsub.f32 %v465, %v481
    %v483 = vsub.f32 %v470, %v481
    %v484 = vmul.f32 %v482, 1.442695
    %v485 = vpow.pop %v484
    %v486 = vmul.f32 %v483, 1.442695
    %v487 = vpow.pop %v486
    %v488 = vsel %vm391, %v485, 0.0
    %v489 = vsel %vm391, %v487, 0.0
    %v490 = vadd.f32 %v488, %v489
    %v491 = vrot.slane %v490, 4
    %v492 = vadd.f32 %v490, %v491
    %v493 = vrot.slane %v492, 2
    %v494 = vadd.f32 %v492, %v493
    %v495 = vrot.slane %v494, 1
    %v496 = vadd.f32 %v494, %v495
    %v497 = vrcp.pop %v496
    %v498 = vmul.f32 %v485, %v497
    %v499 = vmul.f32 %v487, %v497
    %500 = vst.msk [vmem:[#allocation7] sm:$0xff] %vm391, %v498
    %501 = vst.msk [vmem:[#allocation7 + $0x8] sm:$0xff] %vm391, %v499
    %503 = vrot.lane.b32.xlu0 %v235, 112
    %v504 = vpop.permute.xlu0 %503
    %506 = vxpose.xlu0.b32.start [1/16] %v504, 128
    %507 = vxpose.xlu0.b32.cont [2/16] 0.0, 128
    %508 = vxpose.xlu0.b32.cont [3/16] 0.0, 128
    %509 = vxpose.xlu0.b32.cont [4/16] 0.0, 128
    %510 = vxpose.xlu0.b32.cont [5/16] 0.0, 128
    %511 = vxpose.xlu0.b32.cont [6/16] 0.0, 128
    %512 = vxpose.xlu0.b32.cont [7/16] 0.0, 128
    %513 = vxpose.xlu0.b32.cont [8/16] 0.0, 128
    %514 = vxpose.xlu0.b32.cont [9/16] 0.0, 128
    %515 = vxpose.xlu0.b32.cont [10/16] 0.0, 128
    %516 = vxpose.xlu0.b32.cont [11/16] 0.0, 128
    %517 = vxpose.xlu0.b32.cont [12/16] 0.0, 128
    %518 = vxpose.xlu0.b32.cont [13/16] 0.0, 128
    %519 = vxpose.xlu0.b32.cont [14/16] 0.0, 128
    %520 = vxpose.xlu0.b32.cont [15/16] 0.0, 128
    %521 = vxpose.xlu0.b32.end [16/16] 0.0, 128
    %v522 = vpop.trf.xlu0
    %v523 = vpop.trf.xlu0
    %v524 = vpop.trf.xlu0
    %v525 = vpop.trf.xlu0
    %v526 = vpop.trf.xlu0
    %v527 = vpop.trf.xlu0
    %v528 = vpop.trf.xlu0
    %v529 = vpop.trf.xlu0
    %v530 = vpop.trf.xlu0
    %v531 = vpop.trf.xlu0
    %v532 = vpop.trf.xlu0
    %v533 = vpop.trf.xlu0
    %v534 = vpop.trf.xlu0
    %v535 = vpop.trf.xlu0
    %v536 = vpop.trf.xlu0
    %v537 = vpop.trf.xlu0
    %538 = vrot.lane.b32.xlu0 %v295, 112
    %v539 = vpop.permute.xlu0 %538
    %v542 = vsel %vm297, %v522, 0
    %v545 = vsel %vm297, %v523, 0
    %547 = vmatprep.subr.mxu0 0.0
    %548 = vmatpush1.msra.mxu0 %v539
    %549 = vmatprep.subr.mxu0 0.0
    %550 = vmatpush1.msra.mxu0 0.0
    %551 = vmatprep.subr.mxu0 0.0
    %552 = vmatpush1.msra.mxu0 0.0
    %553 = vmatprep.subr.mxu0 0.0
    %554 = vmatpush1.msra.mxu0 0.0
    %555 = vmatprep.subr.mxu0 0.0
    %556 = vmatpush1.msra.mxu0 0.0
    %557 = vmatprep.subr.mxu0 0.0
    %558 = vmatpush1.msra.mxu0 0.0
    %559 = vmatprep.subr.mxu0 0.0
    %560 = vmatpush1.msra.mxu0 0.0
    %561 = vmatprep.subr.mxu0 0.0
    %562 = vmatpush1.msra.mxu0 0.0
    %563 = vmatprep.subr.mxu0 0.0
    %564 = vmatpush1.msra.mxu0 0.0
    %565 = vmatprep.subr.mxu0 0.0
    %566 = vmatpush1.msra.mxu0 0.0
    %567 = vmatprep.subr.mxu0 0.0
    %568 = vmatpush1.msra.mxu0 0.0
    %569 = vmatprep.subr.mxu0 0.0
    %570 = vmatpush1.msra.mxu0 0.0
    %571 = vmatprep.subr.mxu0 0.0
    %572 = vmatpush1.msra.mxu0 0.0
    %573 = vmatprep.subr.mxu0 0.0
    %574 = vmatpush1.msra.mxu0 0.0
    %575 = vmatprep.subr.mxu0 0.0
    %576 = vmatpush1.msra.mxu0 0.0
    %577 = vmatprep.subr.mxu0 0.0
    %578 = vmatpush1.msra.mxu0 0.0
    %579 = vmatprep.subr.mxu0 0.0
    %580 = vmatpush1.msra.mxu0 0.0
    %581 = vmatprep.subr.mxu0 0.0
    %582 = vmatpush1.msra.mxu0 0.0
    %583 = vmatprep.subr.mxu0 0.0
    %584 = vmatpush1.msra.mxu0 0.0
    %585 = vmatprep.subr.mxu0 0.0
    %586 = vmatpush1.msra.mxu0 0.0
    %587 = vmatprep.subr.mxu0 0.0
    %588 = vmatpush1.msra.mxu0 0.0
    %589 = vmatprep.subr.mxu0 0.0
    %590 = vmatpush1.msra.mxu0 0.0
    %591 = vmatprep.subr.mxu0 0.0
    %592 = vmatpush1.msra.mxu0 0.0
    %593 = vmatprep.subr.mxu0 0.0
    %594 = vmatpush1.msra.mxu0 0.0
    %595 = vmatprep.subr.mxu0 0.0
    %596 = vmatpush1.msra.mxu0 0.0
    %597 = vmatprep.subr.mxu0 0.0
    %598 = vmatpush1.msra.mxu0 0.0
    %599 = vmatprep.subr.mxu0 0.0
    %600 = vmatpush1.msra.mxu0 0.0
    %601 = vmatprep.subr.mxu0 0.0
    %602 = vmatpush1.msra.mxu0 0.0
    %603 = vmatprep.subr.mxu0 0.0
    %604 = vmatpush1.msra.mxu0 0.0
    %605 = vmatprep.subr.mxu0 0.0
    %606 = vmatpush1.msra.mxu0 0.0
    %607 = vmatprep.subr.mxu0 0.0
    %608 = vmatpush1.msra.mxu0 0.0
    %609 = vmatprep.subr.mxu0 0.0
    %610 = vmatpush1.msra.mxu0 0.0
    %611 = vmatprep.mubr.f32.mxu0 0.0
    %612 = vmatmul.mubr.f32.gmra.mrb[0].mxu0 %v542
    %v613 = vpop.f32.mrb[0].mxu0
    %v614 = vadd.f32 %v238, %v613
    %v615 = vpop.f32.mrb[0].mxu0
    %616 = vmatprep.mubr.f32.mxu0 0.0
    %617 = vmatmul.mubr.f32.gmra.mrb[0].mxu0 %v545
    %v618 = vpop.f32.mrb[0].mxu0
    %v619 = vadd.f32 %v239, %v618
    %v620 = vpop.f32.mrb[0].mxu0
    %621 = vdwg.mxu0
    %v622 = vxor.u32 %v614, 2147483648
    %v623 = vxor.u32 %v619, 2147483648
    %v624 = vmul.f32 %v622, 1.442695
    %v625 = vpow.pop %v624
    %v626 = vmul.f32 %v623, 1.442695
    %v627 = vpow.pop %v626
    %v628 = vadd.f32 %v625, 1.0
    %v629 = vadd.f32 %v627, 1.0
    %v630 = vrcp.pop %v628
    %v631 = vmul.f32 1.0, %v630
    %v632 = vrcp.pop %v629
    %v633 = vmul.f32 1.0, %v632
    %v635 = vsel %vm391, %v631, 0
    %v638 = vsel %vm391, %v633, 0
    %640 = vmatprep.subr.mxu0 0.0
    %641 = vmatpush1.msra.mxu0 %v240
    %642 = vmatprep.subr.mxu0 0.0
    %643 = vmatpush1.msra.mxu0 %v241
    %644 = vmatprep.subr.mxu0 0.0
    %645 = vmatpush1.msra.mxu0 0.0
    %646 = vmatprep.subr.mxu0 0.0
    %647 = vmatpush1.msra.mxu0 0.0
    %648 = vmatprep.subr.mxu0 0.0
    %649 = vmatpush1.msra.mxu0 0.0
    %650 = vmatprep.subr.mxu0 0.0
    %651 = vmatpush1.msra.mxu0 0.0
    %652 = vmatprep.subr.mxu0 0.0
    %653 = vmatpush1.msra.mxu0 0.0
    %654 = vmatprep.subr.mxu0 0.0
    %655 = vmatpush1.msra.mxu0 0.0
    %656 = vmatprep.subr.mxu0 0.0
    %657 = vmatpush1.msra.mxu0 0.0
    %658 = vmatprep.subr.mxu0 0.0
    %659 = vmatpush1.msra.mxu0 0.0
    %660 = vmatprep.subr.mxu0 0.0
    %661 = vmatpush1.msra.mxu0 0.0
    %662 = vmatprep.subr.mxu0 0.0
    %663 = vmatpush1.msra.mxu0 0.0
    %664 = vmatprep.subr.mxu0 0.0
    %665 = vmatpush1.msra.mxu0 0.0
    %666 = vmatprep.subr.mxu0 0.0
    %667 = vmatpush1.msra.mxu0 0.0
    %668 = vmatprep.subr.mxu0 0.0
    %669 = vmatpush1.msra.mxu0 0.0
    %670 = vmatprep.subr.mxu0 0.0
    %671 = vmatpush1.msra.mxu0 0.0
    %672 = vmatprep.subr.mxu0 0.0
    %673 = vmatpush1.msra.mxu0 0.0
    %674 = vmatprep.subr.mxu0 0.0
    %675 = vmatpush1.msra.mxu0 0.0
    %676 = vmatprep.subr.mxu0 0.0
    %677 = vmatpush1.msra.mxu0 0.0
    %678 = vmatprep.subr.mxu0 0.0
    %679 = vmatpush1.msra.mxu0 0.0
    %680 = vmatprep.subr.mxu0 0.0
    %681 = vmatpush1.msra.mxu0 0.0
    %682 = vmatprep.subr.mxu0 0.0
    %683 = vmatpush1.msra.mxu0 0.0
    %684 = vmatprep.subr.mxu0 0.0
    %685 = vmatpush1.msra.mxu0 0.0
    %686 = vmatprep.subr.mxu0 0.0
    %687 = vmatpush1.msra.mxu0 0.0
    %688 = vmatprep.subr.mxu0 0.0
    %689 = vmatpush1.msra.mxu0 0.0
    %690 = vmatprep.subr.mxu0 0.0
    %691 = vmatpush1.msra.mxu0 0.0
    %692 = vmatprep.subr.mxu0 0.0
    %693 = vmatpush1.msra.mxu0 0.0
    %694 = vmatprep.subr.mxu0 0.0
    %695 = vmatpush1.msra.mxu0 0.0
    %696 = vmatprep.subr.mxu0 0.0
    %697 = vmatpush1.msra.mxu0 0.0
    %698 = vmatprep.subr.mxu0 0.0
    %699 = vmatpush1.msra.mxu0 0.0
    %700 = vmatprep.subr.mxu0 0.0
    %701 = vmatpush1.msra.mxu0 0.0
    %702 = vmatprep.subr.mxu0 0.0
    %703 = vmatpush1.msra.mxu0 0.0
    %704 = vmatprep.mubr.f32.mxu0 0.0
    %705 = vmatmul.mubr.f32.gmra.mrb[0].mxu0 %v635
    %v706 = vpop.f32.mrb[0].mxu0
    %v707 = vadd.f32 0.0, %v706
    %v708 = vpop.f32.mrb[0].mxu0
    %709 = vmatprep.mubr.f32.mxu0 0.0
    %710 = vmatmul.mubr.f32.gmra.mrb[0].mxu0 %v638
    %v711 = vpop.f32.mrb[0].mxu0
    %v712 = vadd.f32 0.0, %v711
    %v713 = vpop.f32.mrb[0].mxu0
    %714 = vdwg.mxu0
    %v715 = vsel %vm391, %v707, -inf
    %v716 = vsel %vm391, %v712, -inf
    %v717 = vmax.f32 %v715, %v716
    %v718 = vrot.slane %v717, 4
    %v719 = vmax.f32 %v717, %v718
    %v720 = vrot.slane %v719, 2
    %v721 = vmax.f32 %v719, %v720
    %v722 = vrot.slane %v721, 1
    %v723 = vmax.f32 %v721, %v722
    %v724 = vsub.f32 %v707, %v723
    %v725 = vsub.f32 %v712, %v723
    %v726 = vmul.f32 %v724, 1.442695
    %v727 = vpow.pop %v726
    %v728 = vmul.f32 %v725, 1.442695
    %v729 = vpow.pop %v728
    %v730 = vsel %vm391, %v727, 0.0
    %v731 = vsel %vm391, %v729, 0.0
    %v732 = vadd.f32 %v730, %v731
    %v733 = vrot.slane %v732, 4
    %v734 = vadd.f32 %v732, %v733
    %v735 = vrot.slane %v734, 2
    %v736 = vadd.f32 %v734, %v735
    %v737 = vrot.slane %v736, 1
    %v738 = vadd.f32 %v736, %v737
    %v739 = vrcp.pop %v738
    %v740 = vmul.f32 %v727, %v739
    %v741 = vmul.f32 %v729, %v739
    %s742 = scalar_lea.vmem [#allocation7], 16
    %743 = vst.msk [vmem:[%s742] sm:$0xff] %vm391, %v740
    %744 = vst.msk [vmem:[%s742 + $0x8] sm:$0xff] %vm391, %v741
    // Predicated region
    $region34: #{tpu_custom_call.1} parent=1 // pred_check
      _
    $region35: #{tpu_custom_call.1} parent=1 // pred_check_branch
      %746 = sbr.rel (0) target = $region37
    $region36: #{tpu_custom_call.1} parent=1 // pred_region
      %s748 = ssub.s32 512, 512
      %749 = vsyncadd [#allocation4], %s748
      %s750 = sshll.u32 [#allocation7], 4
      %s751 = int_to_ptr.vmem [resolvable:$true] %s750
      %756 = dma.vmem_to_hbm [thread:$0]  %s751, 512, %s6, [#allocation4], 128, 128, 8
    $region37: #{tpu_custom_call.1} parent=1 // pred_fallthru
      _
    // Predicated region
    $region38: #{tpu_custom_call.1} parent=1 // pred_check
      _
    $region39: #{tpu_custom_call.1} parent=1 // pred_check_branch
      %758 = sbr.rel (0) target = $region41
    $region40: #{tpu_custom_call.1} parent=1 // pred_region
      %759 = dma.done [#allocation4], 512
    $region41: #{tpu_custom_call.1} parent=1 // pred_fallthru
      _
    %760 = vsyncpa [#allocation3], 1
    %761 = vsyncpa [#allocation4], 1
    %762 = vsyncpa [#allocation5], 1

</llo_original>
